<compile_context>
chip_gen: v7x
topology: tpu7x:2x2x1
jax: 0.10.0
libtpu: 0.0.40
codegen_flags: <defaults>
</compile_context>

<pallas_src>
import jax
import jax.numpy as jnp
from jax.experimental import pallas as pl
from jax.experimental.pallas import tpu as pltpu


def _round_up(n, m):
    return ((n + m - 1) // m) * m


def mine_kernel(x_ref, y_ref, w_ref, out_ref):
    x = x_ref[...]                        # (1, nt)  batch on lanes
    y = y_ref[...]                        # (1, nt)
    w = w_ref[...]                        # (H, 5)   packed params

    w1 = w[:, 0:1]                        # (H, 1) fc1 weight column
    w2 = w[:, 1:2]                        # (H, 1) fc2 weight column
    b12 = w[:, 2:3]                       # (H, 1) fc1.bias + fc2.bias
    w3 = w[:, 3:4]                        # (H, 1) fc3 weight column
    b3 = w[0:1, 4:5]                      # (1, 1) fc3 bias

    # fc1(x) + fc2(y): input feature dim is 1 -> pure VPU broadcasts.
    pre = x * w1 + y * w2 + b12           # (H, nt)
    h1 = jnp.maximum(pre, jnp.float32(0.0))
    # fc3: multiply by the w3 column and reduce over H (sublane axis, XLU).
    out_ref[...] = jnp.sum(h1 * w3, axis=0, keepdims=True) + b3   # (1, nt)


def mine_forward(x, y, params, *, n_tile=1024):
    N = x.shape[0]
    H = params["w1"].shape[0]

    # ---- pack parameters into one (H, 5) array: [w1 | w2 | b1+b2 | w3 | b3]
    w1 = params["w1"].reshape(H).astype(jnp.float32)
    w2 = params["w2"].reshape(H).astype(jnp.float32)
    b12 = (params["b1"] + params["b2"]).reshape(H).astype(jnp.float32)
    w3 = params["w3"].reshape(H).astype(jnp.float32)
    b3 = jnp.full((H,), params["b3"].reshape(())[...], dtype=jnp.float32)
    wpack = jnp.stack([w1, w2, b12, w3, b3], axis=1)              # (H, 5)

    # ---- lane-dense batch layout, padded to a 128-multiple tile -----------
    nt = min(n_tile, _round_up(N, 128))
    nt = _round_up(max(nt, 128), 128)
    Np = _round_up(N, nt)
    xt = jnp.zeros((1, Np), jnp.float32).at[0, :N].set(
        x.reshape(N).astype(jnp.float32))
    yt = jnp.zeros((1, Np), jnp.float32).at[0, :N].set(
        y.reshape(N).astype(jnp.float32))

    out = pl.pallas_call(
        mine_kernel,
        out_shape=jax.ShapeDtypeStruct((1, Np), jnp.float32),
        grid=(Np // nt,),
        in_specs=[
            pl.BlockSpec((1, nt), lambda i: (0, i)),    # x tile
            pl.BlockSpec((1, nt), lambda i: (0, i)),    # y tile
            pl.BlockSpec((H, 5), lambda i: (0, 0)),     # packed params (resident)
        ],
        out_specs=pl.BlockSpec((1, nt), lambda i: (0, i)),
        compiler_params=pltpu.CompilerParams(
            dimension_semantics=("parallel",)),
    )(xt, yt, wpack)

    return out[0, :N].reshape(N, 1)


def init_params(H, key):
    """Deterministic init with PyTorch nn.Linear shapes/convention."""
    k1, k2, k3, k4, k5, k6 = jax.random.split(key, 6)
    # fc1/fc2: weight (H, 1), bias (H,); bound = 1/sqrt(fan_in=1) = 1.0
    w1 = jax.random.uniform(k1, (H, 1), jnp.float32, -1.0, 1.0)
    b1 = jax.random.uniform(k2, (H,), jnp.float32, -1.0, 1.0)
    w2 = jax.random.uniform(k3, (H, 1), jnp.float32, -1.0, 1.0)
    b2 = jax.random.uniform(k4, (H,), jnp.float32, -1.0, 1.0)
    # fc3: weight (1, H), bias (1,); bound = 1/sqrt(H)
    bound3 = 1.0 / jnp.sqrt(jnp.float32(H))
    w3 = jax.random.uniform(k5, (1, H), jnp.float32, -bound3, bound3)
    b3 = jax.random.uniform(k6, (1,), jnp.float32, -bound3, bound3)
    return dict(w1=w1, b1=b1, w2=w2, b2=b2, w3=w3, b3=b3)


def mine_ref(x, y, params):
    """Pure-JAX reference with PyTorch nn.Linear semantics (exact f32 math,
    no MXU, so tolerances reflect the kernel's VPU/XLU path)."""
    h1 = jax.nn.relu(x * params["w1"].reshape(1, -1) + params["b1"]
                     + y * params["w2"].reshape(1, -1) + params["b2"])
    return (jnp.sum(h1 * params["w3"].reshape(1, -1), axis=-1, keepdims=True)
            + params["b3"])


if __name__ == "__main__":
    N, H = 1000, 32          # non-multiple N exercises padding + the 1-D grid
    key = jax.random.PRNGKey(0)
    kx, ky, kp = jax.random.split(key, 3)
    x = jax.random.normal(kx, (N, 1), jnp.float32)
    y = jax.random.normal(ky, (N, 1), jnp.float32)
    params = init_params(H, kp)

    out = jax.block_until_ready(mine_forward(x, y, params, n_tile=256))
    ref = mine_ref(x, y, params)

    assert out.shape == (N, 1)
    assert jnp.allclose(out, ref, atol=1e-5, rtol=1e-5)
    print("KERNEL_OK")
</pallas_src>

<mosaic_0001>
module attributes {stable_mosaic.version = 11 : i64} {
  func.func @mine_kernel(%arg0: i32, %arg1: memref<1x256xf32, #tpu.memory_space<vmem>>, %arg2: memref<1x256xf32, #tpu.memory_space<vmem>>, %arg3: memref<32x5xf32, #tpu.memory_space<vmem>>, %arg4: memref<1x256xf32, #tpu.memory_space<vmem>>) attributes {dimension_semantics = [#tpu.dimension_semantics<parallel>], iteration_bounds = array<i64: 4>, scalar_prefetch = 0 : i64, scratch_operands = 0 : i64, tpu.core_type = #tpu.core_type<tc>, window_params = [{transform_indices = @transform_0, window_bounds = array<i64: 1, 256>}, {transform_indices = @transform_1, window_bounds = array<i64: 1, 256>}, {pipeline_mode = #tpu.pipeline_mode<synchronous>, transform_indices = @transform_2, window_bounds = array<i64: 32, 5>}, {transform_indices = @transform_3, window_bounds = array<i64: 1, 256>}]} {
    %c0 = arith.constant 0 : index
    %c0_0 = arith.constant 0 : index
    %0 = vector.load %arg1[%c0, %c0_0] : memref<1x256xf32, #tpu.memory_space<vmem>>, vector<1x256xf32>
    %c0_1 = arith.constant 0 : index
    %c0_2 = arith.constant 0 : index
    %1 = vector.load %arg2[%c0_1, %c0_2] : memref<1x256xf32, #tpu.memory_space<vmem>>, vector<1x256xf32>
    %c0_3 = arith.constant 0 : index
    %c0_4 = arith.constant 0 : index
    %2 = vector.load %arg3[%c0_3, %c0_4] : memref<32x5xf32, #tpu.memory_space<vmem>>, vector<32x5xf32>
    %3 = vector.extract_strided_slice %2 {offsets = [0, 0], sizes = [32, 1], strides = [1, 1]} : vector<32x5xf32> to vector<32x1xf32>
    %4 = vector.extract_strided_slice %2 {offsets = [0, 1], sizes = [32, 1], strides = [1, 1]} : vector<32x5xf32> to vector<32x1xf32>
    %5 = vector.extract_strided_slice %2 {offsets = [0, 2], sizes = [32, 1], strides = [1, 1]} : vector<32x5xf32> to vector<32x1xf32>
    %6 = vector.extract_strided_slice %2 {offsets = [0, 3], sizes = [32, 1], strides = [1, 1]} : vector<32x5xf32> to vector<32x1xf32>
    %7 = vector.extract_strided_slice %2 {offsets = [0, 4], sizes = [1, 1], strides = [1, 1]} : vector<32x5xf32> to vector<1x1xf32>
    %8 = vector.broadcast %0 : vector<1x256xf32> to vector<32x256xf32>
    %9 = vector.broadcast %3 : vector<32x1xf32> to vector<32x256xf32>
    %10 = arith.mulf %8, %9 : vector<32x256xf32>
    %11 = vector.broadcast %1 : vector<1x256xf32> to vector<32x256xf32>
    %12 = vector.broadcast %4 : vector<32x1xf32> to vector<32x256xf32>
    %13 = arith.mulf %11, %12 : vector<32x256xf32>
    %14 = arith.addf %10, %13 : vector<32x256xf32>
    %15 = vector.broadcast %5 : vector<32x1xf32> to vector<32x256xf32>
    %16 = arith.addf %14, %15 : vector<32x256xf32>
    %cst = arith.constant 0.000000e+00 : f32
    %17 = vector.broadcast %cst : f32 to vector<32x256xf32>
    %18 = arith.maximumf %16, %17 : vector<32x256xf32>
    %19 = vector.broadcast %6 : vector<32x1xf32> to vector<32x256xf32>
    %20 = arith.mulf %18, %19 : vector<32x256xf32>
    %cst_5 = arith.constant dense<0.000000e+00> : vector<256xf32>
    %21 = vector.multi_reduction <add>, %20, %cst_5 [0] : vector<32x256xf32> to vector<256xf32>
    %22 = vector.shape_cast %21 : vector<256xf32> to vector<1x256xf32>
    %23 = vector.broadcast %7 : vector<1x1xf32> to vector<1x256xf32>
    %24 = arith.addf %22, %23 : vector<1x256xf32>
    %c0_6 = arith.constant 0 : index
    %c0_7 = arith.constant 0 : index
    %25 = vector.load %arg4[%c0_6, %c0_7] : memref<1x256xf32, #tpu.memory_space<vmem>>, vector<1x256xf32>
    tpu.vector_store %arg4[%c0_6, %c0_7], %24 {strides = array<i32>} : memref<1x256xf32, #tpu.memory_space<vmem>>, vector<1x256xf32>,
    return
  }
  func.func @transform_0(%arg0: i32) -> (i32, i32) {
    %c0_i32 = arith.constant 0 : i32
    %c0_i32_0 = arith.constant 0 : i32
    return %c0_i32, %arg0 : i32, i32
  }
  func.func @transform_1(%arg0: i32) -> (i32, i32) {
    %c0_i32 = arith.constant 0 : i32
    %c0_i32_0 = arith.constant 0 : i32
    return %c0_i32, %arg0 : i32, i32
  }
  func.func @transform_2(%arg0: i32) -> (i32, i32) {
    %c0_i32 = arith.constant 0 : i32
    %c0_i32_0 = arith.constant 0 : i32
    %c0_i32_1 = arith.constant 0 : i32
    return %c0_i32, %c0_i32_0 : i32, i32
  }
  func.func @transform_3(%arg0: i32) -> (i32, i32) {
    %c0_i32 = arith.constant 0 : i32
    %c0_i32_0 = arith.constant 0 : i32
    return %c0_i32, %arg0 : i32, i32
  }
}

</mosaic_0001>

<llo_original>
// kernel: tpu_custom_call.1
$region0: #{tpu_custom_call.1}
  #allocation0 [shape = 'u32[]', space=smem, size = 0x4, offset = 0x4, fixed_abs, tag = 'smem constant byte address 0x4 - core index']
  #allocation1 [shape = 'u32[144,128]{1,0:T(1,128)}', space=vmem, size = 0x12000, scoped, tag = 'internal scratch']
  %s0 = inlined_call_operand.vmem [shape: f32[1,1024], index: 0, kind: input, shape index: {}]
  %s1 = inlined_call_operand.vmem [shape: f32[1,1024], index: 1, kind: input, shape index: {}]
  %s2 = inlined_call_operand.vmem [shape: f32[32,5], index: 2, kind: input, shape index: {}]
  %s3 = inlined_call_operand.hbm [shape: f32[1,1024], index: 3, kind: output, shape index: {}]
  %s4 = sld [smem:[#allocation0]]
  $region45: #{tpu_custom_call.1} parent=0
    _
  %s6 = ssub.s32 1, %s4
  %s7 = scalar_select 0, %s6, %s4
  $region1: #{tpu_custom_call.1} parent=0
    #allocation2 [shape = 'u8[2048]{0}', space=vmem, size = 0x800, scoped, tag = 'output window, operand 0']
    #allocation3 [shape = 's32[2]{0}', space=sflag, size = 0x8, scoped, tag = 'scoped memory for tpu_custom_call.1']
    %8 = vsyncpa [#allocation3], 0
    %s9 = scalar_lea.sflag [#allocation3], 1
    %10 = vsyncpa %s9, 0
    loop: start=0, step=1, limit=6
    $region2: #{tpu_custom_call.1} parent=1 // loop_pre_header
      _
    $region3: #{tpu_custom_call.1} parent=1 // loop_header
      %s12 = sphi 0, %s16
      %p13 = scmp.ge.s32.totalorder %s12, 6
      %s22 = sphi 0, %s24
      %s25 = sphi 0, %s22
      %s26 = sphi 0, %s25
      %s42 = sphi 0, %s26
      %s48 = sphi 0, %s50
      %s51 = sphi 0, %s48
      %s52 = sphi 0, %s51
      %s68 = sphi 0, %s52
      %s72 = sphi 0, %s72
      %s74 = sphi 0, %s72
      %s75 = sphi 0, %s74
      %s89 = sphi 0, %s75
      %s95 = sphi 0, %s97
      %s98 = sphi 0, %s95
      %s99 = sphi 0, %s98
      %s115 = sphi 0, %s99
    $region4: #{tpu_custom_call.1} parent=1 // loop_header_branch
      %15 = sbr.rel (%p13) target = $region8
    $region5: #{tpu_custom_call.1} parent=1 // loop_body
      %s17 = ssub.s32 %s12, 1
      %s18 = ssub.s32 %s12, 2
      %s19 = sadd.s32 %s12, 1
      %s20 = ssub.s32 %s12, %s19
      %p21 = scmp.eq.s32.totalorder %s20, 0
      %s23 = sadd.s32 %s22, 1
      %s24 = scalar_select %p21, %s22, %s23
      %p27 = pneg %p21
      %p28 = scmp.eq.s32.totalorder %s12, 3
      %p29 = por %p27, %p28
      %p30 = scmp.ne.s32.totalorder %s22, %s25
      %p31 = scmp.eq.s32.totalorder %s12, 0
      %p32 = por %p30, %p31
      %p33 = scmp.ne.s32.totalorder %s22, %s25
      %p34 = scmp.eq.s32.totalorder %s17, 3
      %p35 = por %p33, %p34
      %p36 = scmp.ne.s32.totalorder %s25, %s26
      %p37 = scmp.eq.s32.totalorder %s17, 0
      %p38 = por %p36, %p37
      %p39 = scmp.ne.s32.totalorder %s25, %s26
      %p40 = scmp.eq.s32.totalorder %s18, 3
      %p41 = por %p39, %p40
      %p43 = scmp.ne.s32.totalorder %s26, %s42
      %p44 = scmp.eq.s32.totalorder %s18, 0
      %p45 = por %p43, %p44
      %s46 = ssub.s32 %s12, %s19
      %p47 = scmp.eq.s32.totalorder %s46, 0
      %s49 = sadd.s32 %s48, 1
      %s50 = scalar_select %p47, %s48, %s49
      %p53 = pneg %p47
      %p54 = scmp.eq.s32.totalorder %s12, 3
      %p55 = por %p53, %p54
      %p56 = scmp.ne.s32.totalorder %s48, %s51
      %p57 = scmp.eq.s32.totalorder %s12, 0
      %p58 = por %p56, %p57
      %p59 = scmp.ne.s32.totalorder %s48, %s51
      %p60 = scmp.eq.s32.totalorder %s17, 3
      %p61 = por %p59, %p60
      %p62 = scmp.ne.s32.totalorder %s51, %s52
      %p63 = scmp.eq.s32.totalorder %s17, 0
      %p64 = por %p62, %p63
      %p65 = scmp.ne.s32.totalorder %s51, %s52
      %p66 = scmp.eq.s32.totalorder %s18, 3
      %p67 = por %p65, %p66
      %p69 = scmp.ne.s32.totalorder %s52, %s68
      %p70 = scmp.eq.s32.totalorder %s18, 0
      %p71 = por %p69, %p70
      %s73 = sadd.s32 %s72, 1
      %p76 = scmp.eq.s32.totalorder %s12, 3
      %p77 = scmp.ne.s32.totalorder %s72, %s74
      %p78 = scmp.eq.s32.totalorder %s12, 0
      %p79 = por %p77, %p78
      %p80 = scmp.ne.s32.totalorder %s72, %s74
      %p81 = scmp.eq.s32.totalorder %s17, 3
      %p82 = por %p80, %p81
      %p83 = scmp.ne.s32.totalorder %s74, %s75
      %p84 = scmp.eq.s32.totalorder %s17, 0
      %p85 = por %p83, %p84
      %p86 = scmp.ne.s32.totalorder %s74, %s75
      %p87 = scmp.eq.s32.totalorder %s18, 3
      %p88 = por %p86, %p87
      %p90 = scmp.ne.s32.totalorder %s75, %s89
      %p91 = scmp.eq.s32.totalorder %s18, 0
      %p92 = por %p90, %p91
      %s93 = ssub.s32 %s12, %s19
      %p94 = scmp.eq.s32.totalorder %s93, 0
      %s96 = sadd.s32 %s95, 1
      %s97 = scalar_select %p94, %s95, %s96
      %p100 = pneg %p94
      %p101 = scmp.eq.s32.totalorder %s12, 3
      %p102 = por %p100, %p101
      %p103 = scmp.ne.s32.totalorder %s95, %s98
      %p104 = scmp.eq.s32.totalorder %s12, 0
      %p105 = por %p103, %p104
      %p106 = scmp.ne.s32.totalorder %s95, %s98
      %p107 = scmp.eq.s32.totalorder %s17, 3
      %p108 = por %p106, %p107
      %p109 = scmp.ne.s32.totalorder %s98, %s99
      %p110 = scmp.eq.s32.totalorder %s17, 0
      %p111 = por %p109, %p110
      %p112 = scmp.ne.s32.totalorder %s98, %s99
      %p113 = scmp.eq.s32.totalorder %s18, 3
      %p114 = por %p112, %p113
      %p116 = scmp.ne.s32.totalorder %s99, %s115
      %p117 = scmp.eq.s32.totalorder %s18, 0
      %p118 = por %p116, %p117
      %p119 = scmp.le.s32.totalorder 1, %s12
      %p120 = scmp.lt.s32.totalorder %s12, 5
      %p121 = pnand %p119, %p120
      %p122 = pneg %p121
      // Predicated region
      $region9: #{tpu_custom_call.1} parent=5 // pred_check
        _
      $region10: #{tpu_custom_call.1} parent=5 // pred_check_branch
        %124 = sbr.rel (%p121) target = $region12
      $region11: #{tpu_custom_call.1} parent=5 // pred_region
        %s125 = ssub.s32 %s12, 1
        // Predicated region
        $region13: #{tpu_custom_call.1} parent=11 // pred_check
          %p126 = pneg %p85
        $region14: #{tpu_custom_call.1} parent=11 // pred_check_branch
          %128 = sbr.rel (%p126) target = $region16
        $region15: #{tpu_custom_call.1} parent=11 // pred_region
          _
        $region16: #{tpu_custom_call.1} parent=11 // pred_fallthru
          _
      $region12: #{tpu_custom_call.1} parent=5 // pred_fallthru
        _
      %p129 = scmp.lt.s32.totalorder %s12, 4
      // Predicated region
      $region17: #{tpu_custom_call.1} parent=5 // pred_check
        %p130 = pneg %p129
      $region18: #{tpu_custom_call.1} parent=5 // pred_check_branch
        %132 = sbr.rel (%p130) target = $region20
      $region19: #{tpu_custom_call.1} parent=5 // pred_region
        // Predicated region
        $region21: #{tpu_custom_call.1} parent=19 // pred_check
          %p133 = pneg %p32
        $region22: #{tpu_custom_call.1} parent=19 // pred_check_branch
          %135 = sbr.rel (%p133) target = $region24
        $region23: #{tpu_custom_call.1} parent=19 // pred_region
          %s136 = smul.u32 2, %s12
          %p137 = scmp.lt.s32.totalorder %s136, 7
          %s138 = scalar_select %p137, %s136, 7
          %s139 = scalar_lea.vmem %s0, %s138
          %s140 = smul.u32 2, %s12
        $region24: #{tpu_custom_call.1} parent=19 // pred_fallthru
          _
        // Predicated region
        $region25: #{tpu_custom_call.1} parent=19 // pred_check
          %p141 = pneg %p58
        $region26: #{tpu_custom_call.1} parent=19 // pred_check_branch
          %143 = sbr.rel (%p141) target = $region28
        $region27: #{tpu_custom_call.1} parent=19 // pred_region
          %s144 = smul.u32 2, %s12
          %p145 = scmp.lt.s32.totalorder %s144, 7
          %s146 = scalar_select %p145, %s144, 7
          %s147 = scalar_lea.vmem %s1, %s146
          %s148 = smul.u32 2, %s12
        $region28: #{tpu_custom_call.1} parent=19 // pred_fallthru
          _
      $region20: #{tpu_custom_call.1} parent=5 // pred_fallthru
        _
      %p149 = scmp.le.s32.totalorder 1, %s12
      %p150 = scmp.lt.s32.totalorder %s12, 5
      %p151 = pnand %p149, %p150
      %p152 = pneg %p151
      // Predicated region
      $region29: #{tpu_custom_call.1} parent=5 // pred_check
        _
      $region30: #{tpu_custom_call.1} parent=5 // pred_check_branch
        %154 = sbr.rel (%p151) target = $region32
      $region31: #{tpu_custom_call.1} parent=5 // pred_region
        %s155 = ssub.s32 %s12, 1
        %s156 = smul.u32 2, %s17
        %p157 = scmp.lt.s32.totalorder %s156, 7
        %s158 = scalar_select %p157, %s156, 7
        %s159 = scalar_lea.vmem %s0, %s158
        %p160 = pneg %p38
        %p161 = pneg %p35
        %s162 = smul.u32 2, %s17
        %p163 = scmp.lt.s32.totalorder %s162, 7
        %s164 = scalar_select %p163, %s162, 7
        %s165 = scalar_lea.vmem %s1, %s164
        %p166 = pneg %p64
        %p167 = pneg %p61
        %p168 = pneg %p85
        %p169 = pneg %p82
        %p170 = pneg %p111
        %p171 = pneg %p108
        %s172 = sand.u32 %s98, 1
        %s173 = scalar_lea.sflag [#allocation3], %s172
        %s174 = sand.u32 %s98, 1
        %s175 = smul.addr %s174, 2
        %s176 = scalar_lea.vmem [#allocation2], %s175
        %s177 = smul.u32 2, %s17
        %p178 = scmp.lt.s32.totalorder %s177, 7
        %s179 = scalar_select %p178, %s177, 7
        %s180 = scalar_lea.vmem %s0, %s179
        %s181 = smul.u32 2, %s17
        %s182 = smul.u32 2, %s17
        %p183 = scmp.lt.s32.totalorder %s182, 7
        %s184 = scalar_select %p183, %s182, 7
        %s185 = scalar_lea.vmem %s1, %s184
        %s186 = smul.u32 2, %s17
        %s187 = smul.u32 2, %s17
        %v188 = vld [vmem:[%s180] sm:$0x3]
        %v189 = vld [vmem:[%s185] sm:$0x3]
        %v190 = vld [vmem:[%s2] sm:$0xff]
        %v191 = vld [vmem:[%s2 + $0x8] sm:$0xff]
        %v192 = vld [vmem:[%s2 + $0x10] sm:$0xff]
        %v193 = vld [vmem:[%s2 + $0x18] sm:$0xff]
        %v195 = vlaneseq
        %v196 = vshrl.u32 %v195, 7
        %v197 = vsub.s32 0, %v196
        %v198 = vrot.slane %v188, %v197
        %v199 = vlaneseq
        %v200 = vshrl.u32 %v199, 7
        %v201 = vsub.s32 1, %v200
        %v202 = vrot.slane %v188, %v201
        %206 = vset.pattern.permute.xlu0 0
        %207 = vperm.xlu0 %206, %v190
        %v208 = vpop.permute.xlu0 %207
        %211 = vset.pattern.permute.xlu0 0
        %212 = vperm.xlu0 %211, %v191
        %v213 = vpop.permute.xlu0 %212
        %216 = vset.pattern.permute.xlu0 0
        %217 = vperm.xlu0 %216, %v192
        %v218 = vpop.permute.xlu0 %217
        %221 = vset.pattern.permute.xlu0 0
        %222 = vperm.xlu0 %221, %v193
        %v223 = vpop.permute.xlu0 %222
        %v225 = vmul.f32 %v198, %v208
        %v226 = vmul.f32 %v202, %v208
        %v227 = vmul.f32 %v198, %v213
        %v228 = vmul.f32 %v202, %v213
        %v229 = vmul.f32 %v198, %v218
        %v230 = vmul.f32 %v202, %v218
        %v231 = vmul.f32 %v198, %v223
        %v232 = vmul.f32 %v202, %v223
        %v234 = vlaneseq
        %v235 = vshrl.u32 %v234, 7
        %v236 = vsub.s32 0, %v235
        %v237 = vrot.slane %v189, %v236
        %v238 = vlaneseq
        %v239 = vshrl.u32 %v238, 7
        %v240 = vsub.s32 1, %v239
        %v241 = vrot.slane %v189, %v240
        %244 = vset.pattern.permute.xlu0 1
        %245 = vperm.xlu0 %244, %v190
        %v246 = vpop.permute.xlu0 %245
        %248 = vset.pattern.permute.xlu0 1
        %249 = vperm.xlu0 %248, %v191
        %v250 = vpop.permute.xlu0 %249
        %252 = vset.pattern.permute.xlu0 1
        %253 = vperm.xlu0 %252, %v192
        %v254 = vpop.permute.xlu0 %253
        %256 = vset.pattern.permute.xlu0 1
        %257 = vperm.xlu0 %256, %v193
        %v258 = vpop.permute.xlu0 %257
        %v260 = vmul.f32 %v237, %v246
        %v261 = vmul.f32 %v241, %v246
        %v262 = vmul.f32 %v237, %v250
        %v263 = vmul.f32 %v241, %v250
        %v264 = vmul.f32 %v237, %v254
        %v265 = vmul.f32 %v241, %v254
        %v266 = vmul.f32 %v237, %v258
        %v267 = vmul.f32 %v241, %v258
        %v268 = vadd.f32 %v225, %v260
        %v269 = vadd.f32 %v226, %v261
        %v270 = vadd.f32 %v227, %v262
        %v271 = vadd.f32 %v228, %v263
        %v272 = vadd.f32 %v229, %v264
        %v273 = vadd.f32 %v230, %v265
        %v274 = vadd.f32 %v231, %v266
        %v275 = vadd.f32 %v232, %v267
        %276 = vset.pattern.permute.xlu0 2
        %277 = vperm.xlu0 %276, %v190
        %v278 = vpop.permute.xlu0 %277
        %280 = vset.pattern.permute.xlu0 2
        %281 = vperm.xlu0 %280, %v191
        %v282 = vpop.permute.xlu0 %281
        %284 = vset.pattern.permute.xlu0 2
        %285 = vperm.xlu0 %284, %v192
        %v286 = vpop.permute.xlu0 %285
        %288 = vset.pattern.permute.xlu0 2
        %289 = vperm.xlu0 %288, %v193
        %v290 = vpop.permute.xlu0 %289
        %v292 = vadd.f32 %v268, %v278
        %v293 = vadd.f32 %v269, %v278
        %v294 = vadd.f32 %v270, %v282
        %v295 = vadd.f32 %v271, %v282
        %v296 = vadd.f32 %v272, %v286
        %v297 = vadd.f32 %v273, %v286
        %v298 = vadd.f32 %v274, %v290
        %v299 = vadd.f32 %v275, %v290
        %v300 = vmax.f32 %v292, 0.0
        %v301 = vmax.f32 %v293, 0.0
        %v302 = vmax.f32 %v294, 0.0
        %v303 = vmax.f32 %v295, 0.0
        %v304 = vmax.f32 %v296, 0.0
        %v305 = vmax.f32 %v297, 0.0
        %v306 = vmax.f32 %v298, 0.0
        %v307 = vmax.f32 %v299, 0.0
        %308 = vset.pattern.permute.xlu0 3
        %309 = vperm.xlu0 %308, %v190
        %v310 = vpop.permute.xlu0 %309
        %312 = vset.pattern.permute.xlu0 3
        %313 = vperm.xlu0 %312, %v191
        %v314 = vpop.permute.xlu0 %313
        %316 = vset.pattern.permute.xlu0 3
        %317 = vperm.xlu0 %316, %v192
        %v318 = vpop.permute.xlu0 %317
        %320 = vset.pattern.permute.xlu0 3
        %321 = vperm.xlu0 %320, %v193
        %v322 = vpop.permute.xlu0 %321
        %v324 = vmul.f32 %v300, %v310
        %v325 = vmul.f32 %v301, %v310
        %v326 = vmul.f32 %v302, %v314
        %v327 = vmul.f32 %v303, %v314
        %v328 = vmul.f32 %v304, %v318
        %v329 = vmul.f32 %v305, %v318
        %v330 = vmul.f32 %v306, %v322
        %v331 = vmul.f32 %v307, %v322
        %v332 = vadd.f32 %v324, %v326
        %v333 = vadd.f32 %v332, %v328
        %v334 = vadd.f32 %v333, %v330
        %v335 = vrot.slane %v334, 4
        %v336 = vadd.f32 %v334, %v335
        %v337 = vrot.slane %v336, 2
        %v338 = vadd.f32 %v336, %v337
        %v339 = vrot.slane %v338, 1
        %v340 = vadd.f32 %v338, %v339
        %v341 = vadd.f32 %v325, %v327
        %v342 = vadd.f32 %v341, %v329
        %v343 = vadd.f32 %v342, %v331
        %v344 = vrot.slane %v343, 4
        %v345 = vadd.f32 %v343, %v344
        %v346 = vrot.slane %v345, 2
        %v347 = vadd.f32 %v345, %v346
        %v348 = vrot.slane %v347, 1
        %v349 = vadd.f32 %v347, %v348
        %350 = vset.pattern.permute.xlu0 4
        %351 = vperm.xlu0 %350, %v190
        %v352 = vpop.permute.xlu0 %351
        %v354 = vadd.f32 %v340, %v352
        %v355 = vadd.f32 %v349, %v352
        %v358 = vcombine.low %v354, %v355
        %v360 = vunpack.c.l.s4 1966171168
        %v361 = vunpack.c.0.s8 %v360
        %v362 = vlaneseq
        %v363 = vshrl.u32 %v362, 7
        %v364 = vsub.s32 %v361, %v363
        %v365 = vrot.slane %v358, %v364
        %v367 = vunpack.c.l.s4 1966171168
        %v368 = vunpack.c.0.s8 %v367
        %v369 = vlaneseq
        %v370 = vshrl.u32 %v369, 7
        %v371 = vsub.s32 %v368, %v370
        %v372 = vrot.slane %v365, %v371
        %v374 = vlaneseq
        %vm375 = vcmp.ge.s32.totalorder %v374, 0
        %vm376 = vcmp.lt.s32.totalorder %v374, 256
        %vm377 = vmand %vm375, %vm376
        %378 = vst.msk [vmem:[%s176] sm:$0x3] %vm377, %v372
        %s379 = sand.u32 %s98, 1
        %s380 = scalar_lea.sflag [#allocation3], %s379
        %s381 = sand.u32 %s98, 1
        %s382 = smul.addr %s381, 2
        %s383 = scalar_lea.vmem [#allocation2], %s382
        // Predicated region
        $region33: #{tpu_custom_call.1} parent=31 // pred_check
          %p384 = pneg %p108
        $region34: #{tpu_custom_call.1} parent=31 // pred_check_branch
          %386 = sbr.rel (%p384) target = $region36
        $region35: #{tpu_custom_call.1} parent=31 // pred_region
          %s387 = smul.u32 2, %s17
          %s389 = ssub.s32 32, 32
          %390 = vsyncadd %s380, %s389
          %s391 = smul.addr %s387, 16
          %s392 = scalar_lea.hbm %s3, %s391
          %s394 = sshll.u32 %s383, 4
          %s395 = int_to_ptr.vmem [resolvable:$true] %s394
          %397 = dma.vmem_to_hbm [thread:$0]  %s395, 32, %s392, %s380
        $region36: #{tpu_custom_call.1} parent=31 // pred_fallthru
          _
      $region32: #{tpu_custom_call.1} parent=5 // pred_fallthru
        _
      %p398 = scmp.le.s32.totalorder 2, %s12
      // Predicated region
      $region37: #{tpu_custom_call.1} parent=5 // pred_check
        %p399 = pneg %p398
      $region38: #{tpu_custom_call.1} parent=5 // pred_check_branch
        %401 = sbr.rel (%p399) target = $region40
      $region39: #{tpu_custom_call.1} parent=5 // pred_region
        %s402 = ssub.s32 %s12, 2
        // Predicated region
        $region41: #{tpu_custom_call.1} parent=39 // pred_check
          %p403 = pneg %p114
        $region42: #{tpu_custom_call.1} parent=39 // pred_check_branch
          %405 = sbr.rel (%p403) target = $region44
        $region43: #{tpu_custom_call.1} parent=39 // pred_region
          %s406 = sand.u32 %s99, 1
          %s407 = scalar_lea.sflag [#allocation3], %s406
          %s408 = sand.u32 %s99, 1
          %s409 = smul.addr %s408, 2
          %s410 = scalar_lea.vmem [#allocation2], %s409
          %411 = dma.done %s407, 32
        $region44: #{tpu_custom_call.1} parent=39 // pred_fallthru
          _
      $region40: #{tpu_custom_call.1} parent=5 // pred_fallthru
        _
    $region6: #{tpu_custom_call.1} parent=1 // loop_footer
      %s16 = sadd.s32 1, %s12
    $region7: #{tpu_custom_call.1} parent=1 // loop_footer_branch
      %11 = sbr.rel target = $region3
    $region8: #{tpu_custom_call.1} parent=1 // loop_exit
      _
    %412 = vsyncpa [#allocation3], 1
    %s413 = scalar_lea.sflag [#allocation3], 1
    %414 = vsyncpa %s413, 1

</llo_original>
